<compile_context>
chip_gen: v7x
topology: tpu7x:2x2x1
jax: 0.10.0
libtpu: 0.0.40
codegen_flags: <defaults>
</compile_context>

<pallas_src>
import jax
import jax.numpy as jnp
from jax.experimental import pallas as pl
from jax.experimental.pallas import tpu as pltpu


def mlp_kernel(x_ref, w1_ref, b1_ref, w2_ref, b2_ref, w3_ref, b3_ref, o_ref):
    # x_ref: (D, TM) -- batch on lanes.
    x = x_ref[...]
    # fc1 + relu: (32, D) @ (D, TM) -> (32, TM)   (MXU, f32 accumulate)
    h1 = jnp.dot(w1_ref[...], x, preferred_element_type=jnp.float32)
    h1 = jnp.maximum(h1 + b1_ref[...], 0.0)
    # fc2 + relu: (16, 32) @ (32, TM) -> (16, TM)
    h2 = jnp.dot(w2_ref[...], h1, preferred_element_type=jnp.float32)
    h2 = jnp.maximum(h2 + b2_ref[...], 0.0)
    # fc3 (16 -> 1): VPU multiply + sublane reduction instead of an M=1 matmul that
    # would waste a whole MXU tile; result is a lane-dense (1, TM) row.
    h3 = jnp.sum(h2 * w3_ref[...], axis=0, keepdims=True) + b3_ref[...]
    o_ref[...] = h3.astype(o_ref.dtype)


def linear_regression_model(x, params, *, tm_max=512):
    """Forward pass of LinearRegressionModel: fc1->relu->fc2->relu->fc3.

    x: (batch, input_dim) float32. params in PyTorch layout (see init_params).
    """
    w1, b1, w2, b2, w3, b3 = params
    batch, input_dim = x.shape

    # --- batch tile / padding -------------------------------------------------
    if batch <= tm_max:
        tm = batch                        # single tile; block == full dims is always legal
        padded = batch
    else:
        tm = tm_max                       # multiple of 128 -> unmasked, lane-dense stores
        padded = pl.cdiv(batch, tm) * tm  # pad tail tile instead of OOB reads

    x_t = x.T                             # (D, batch): batch on the lane axis
    if padded != batch:
        x_t = jnp.pad(x_t, ((0, 0), (0, padded - batch)))

    grid = (padded // tm,)

    # weights/biases: constant index_map -> DMA'd once, stay VMEM-resident across tiles
    def const_spec(shape):
        return pl.BlockSpec(shape, lambda i: (0, 0))

    flops = 2 * padded * (input_dim * 32 + 32 * 16 + 16 * 1)
    param_bytes = sum(int(p.size) * p.dtype.itemsize for p in params)
    bytes_accessed = 4 * padded * (input_dim + 1) + param_bytes

    out = pl.pallas_call(
        mlp_kernel,
        out_shape=jax.ShapeDtypeStruct((1, padded), jnp.float32),
        grid_spec=pltpu.PrefetchScalarGridSpec(
            num_scalar_prefetch=0,
            grid=grid,
            in_specs=[
                pl.BlockSpec((input_dim, tm), lambda i: (0, i)),   # x.T batch tile
                const_spec(w1.shape), const_spec(b1.shape),
                const_spec(w2.shape), const_spec(b2.shape),
                const_spec(w3.shape), const_spec(b3.shape),
            ],
            out_specs=pl.BlockSpec((1, tm), lambda i: (0, i)),
        ),
        compiler_params=pltpu.CompilerParams(
            dimension_semantics=("parallel",),     # shard batch tiles across TCs on v7x
            vmem_limit_bytes=32 * 1024 * 1024,     # safe on v5e/v6e/v7x; per-tile footprint is tiny
        ),
        cost_estimate=pl.CostEstimate(
            flops=flops, transcendentals=0, bytes_accessed=bytes_accessed),
    )(x_t, w1, b1, w2, b2, w3, b3)

    # (1, padded) lane-dense row -> (batch, 1) column, dropping padding
    return out.reshape(padded, 1)[:batch]


def init_params(key, input_dim):
    """PyTorch-style nn.Linear init: U(-1/sqrt(fan_in), 1/sqrt(fan_in)).

    Weights are stored in PyTorch layout [out_features, in_features]; biases as
    column vectors (out_features, 1) so they broadcast over the lane (batch) axis
    inside the kernel. w3 is stored transposed, (16, 1), to feed the in-kernel
    sublane-broadcast multiply for the final 16->1 layer.
    """
    dims = [(input_dim, 32), (32, 16), (16, 1)]
    params = []
    for i, (fan_in, fan_out) in enumerate(dims):
        kw, kb = jax.random.split(jax.random.fold_in(key, i))
        bound = 1.0 / (fan_in ** 0.5)
        w = jax.random.uniform(kw, (fan_out, fan_in), jnp.float32, -bound, bound)
        b = jax.random.uniform(kb, (fan_out, 1), jnp.float32, -bound, bound)
        params.extend([w, b])
    w1, b1, w2, b2, w3, b3 = params
    return (w1, b1, w2, b2, w3.T, b3)   # w3: (1,16) -> (16,1)


if __name__ == "__main__":
    key = jax.random.PRNGKey(0)
    input_dim = 16
    params = init_params(key, input_dim)
    w1, b1, w2, b2, w3, b3 = params

    def ref_forward(xx):
        h = jnp.maximum(xx @ w1.T + b1.T, 0.0)
        h = jnp.maximum(h @ w2.T + b2.T, 0.0)
        return h @ w3 + b3.T

    # small, single-tile path (batch=8)
    x_small = jax.random.normal(jax.random.fold_in(key, 100), (8, input_dim), jnp.float32)
    out_small = linear_regression_model(x_small, params)
    jax.block_until_ready(out_small)
    assert out_small.shape == (8, 1)
    assert jnp.allclose(out_small, ref_forward(x_small), atol=1e-5), "mismatch (single tile)"

    # gridded + padded path (batch not a multiple of the tile) exercises the grid machinery
    x_big = jax.random.normal(jax.random.fold_in(key, 200), (300, input_dim), jnp.float32)
    out_big = linear_regression_model(x_big, params, tm_max=128)
    jax.block_until_ready(out_big)
    assert out_big.shape == (300, 1)
    assert jnp.allclose(out_big, ref_forward(x_big), atol=1e-5), "mismatch (gridded)"

    # NOTE: for realistic large batches on v6e/v7x, casting x/w1/w2 to bfloat16 (keeping
    # preferred_element_type=f32) halves HBM traffic; kept f32 here for exact reference checks.
    print("KERNEL_OK")
</pallas_src>

<mosaic_0001>
module attributes {stable_mosaic.version = 11 : i64} {
  func.func @mlp_kernel(%arg0: i32, %arg1: memref<16x8xf32, #tpu.memory_space<vmem>>, %arg2: memref<32x16xf32, #tpu.memory_space<vmem>>, %arg3: memref<32x1xf32, #tpu.memory_space<vmem>>, %arg4: memref<16x32xf32, #tpu.memory_space<vmem>>, %arg5: memref<16x1xf32, #tpu.memory_space<vmem>>, %arg6: memref<16x1xf32, #tpu.memory_space<vmem>>, %arg7: memref<1x1xf32, #tpu.memory_space<vmem>>, %arg8: memref<1x8xf32, #tpu.memory_space<vmem>>) attributes {dimension_semantics = [#tpu.dimension_semantics<parallel>], iteration_bounds = array<i64: 1>, scalar_prefetch = 0 : i64, scratch_operands = 0 : i64, tpu.core_type = #tpu.core_type<tc>, window_params = [{transform_indices = @transform_0, window_bounds = array<i64: 16, 8>}, {pipeline_mode = #tpu.pipeline_mode<synchronous>, transform_indices = @transform_1, window_bounds = array<i64: 32, 16>}, {pipeline_mode = #tpu.pipeline_mode<synchronous>, transform_indices = @transform_2, window_bounds = array<i64: 32, 1>}, {pipeline_mode = #tpu.pipeline_mode<synchronous>, transform_indices = @transform_3, window_bounds = array<i64: 16, 32>}, {pipeline_mode = #tpu.pipeline_mode<synchronous>, transform_indices = @transform_4, window_bounds = array<i64: 16, 1>}, {pipeline_mode = #tpu.pipeline_mode<synchronous>, transform_indices = @transform_5, window_bounds = array<i64: 16, 1>}, {pipeline_mode = #tpu.pipeline_mode<synchronous>, transform_indices = @transform_6, window_bounds = array<i64: 1, 1>}, {transform_indices = @transform_7, window_bounds = array<i64: 1, 8>}]} {
    %c0 = arith.constant 0 : index
    %c0_0 = arith.constant 0 : index
    %0 = vector.load %arg1[%c0, %c0_0] : memref<16x8xf32, #tpu.memory_space<vmem>>, vector<16x8xf32>
    %c0_1 = arith.constant 0 : index
    %c0_2 = arith.constant 0 : index
    %1 = vector.load %arg2[%c0_1, %c0_2] : memref<32x16xf32, #tpu.memory_space<vmem>>, vector<32x16xf32>
    %cst = arith.constant dense<0.000000e+00> : vector<32x8xf32>
    %2 = tpu.matmul %1, %0, %cst {dimension_numbers = #tpu.dot_dimension_numbers<[1], [0], [0], [1], [0, 0, 1, 1], [], []>} : vector<32x16xf32>, vector<16x8xf32>, vector<32x8xf32> -> vector<32x8xf32>
    %c0_3 = arith.constant 0 : index
    %c0_4 = arith.constant 0 : index
    %3 = vector.load %arg3[%c0_3, %c0_4] : memref<32x1xf32, #tpu.memory_space<vmem>>, vector<32x1xf32>
    %4 = vector.broadcast %3 : vector<32x1xf32> to vector<32x8xf32>
    %5 = arith.addf %2, %4 : vector<32x8xf32>
    %cst_5 = arith.constant 0.000000e+00 : f32
    %6 = vector.broadcast %cst_5 : f32 to vector<32x8xf32>
    %7 = arith.maximumf %5, %6 : vector<32x8xf32>
    %c0_6 = arith.constant 0 : index
    %c0_7 = arith.constant 0 : index
    %8 = vector.load %arg4[%c0_6, %c0_7] : memref<16x32xf32, #tpu.memory_space<vmem>>, vector<16x32xf32>
    %cst_8 = arith.constant dense<0.000000e+00> : vector<16x8xf32>
    %9 = tpu.matmul %8, %7, %cst_8 {dimension_numbers = #tpu.dot_dimension_numbers<[1], [0], [0], [1], [0, 0, 1, 1], [], []>} : vector<16x32xf32>, vector<32x8xf32>, vector<16x8xf32> -> vector<16x8xf32>
    %c0_9 = arith.constant 0 : index
    %c0_10 = arith.constant 0 : index
    %10 = vector.load %arg5[%c0_9, %c0_10] : memref<16x1xf32, #tpu.memory_space<vmem>>, vector<16x1xf32>
    %11 = vector.broadcast %10 : vector<16x1xf32> to vector<16x8xf32>
    %12 = arith.addf %9, %11 : vector<16x8xf32>
    %cst_11 = arith.constant 0.000000e+00 : f32
    %13 = vector.broadcast %cst_11 : f32 to vector<16x8xf32>
    %14 = arith.maximumf %12, %13 : vector<16x8xf32>
    %c0_12 = arith.constant 0 : index
    %c0_13 = arith.constant 0 : index
    %15 = vector.load %arg6[%c0_12, %c0_13] : memref<16x1xf32, #tpu.memory_space<vmem>>, vector<16x1xf32>
    %16 = vector.broadcast %15 : vector<16x1xf32> to vector<16x8xf32>
    %17 = arith.mulf %14, %16 : vector<16x8xf32>
    %cst_14 = arith.constant dense<0.000000e+00> : vector<8xf32>
    %18 = vector.multi_reduction <add>, %17, %cst_14 [0] : vector<16x8xf32> to vector<8xf32>
    %19 = vector.shape_cast %18 : vector<8xf32> to vector<1x8xf32>
    %c0_15 = arith.constant 0 : index
    %c0_16 = arith.constant 0 : index
    %20 = vector.load %arg7[%c0_15, %c0_16] : memref<1x1xf32, #tpu.memory_space<vmem>>, vector<1x1xf32>
    %21 = vector.broadcast %20 : vector<1x1xf32> to vector<1x8xf32>
    %22 = arith.addf %19, %21 : vector<1x8xf32>
    %c0_17 = arith.constant 0 : index
    %c0_18 = arith.constant 0 : index
    %23 = vector.load %arg8[%c0_17, %c0_18] : memref<1x8xf32, #tpu.memory_space<vmem>>, vector<1x8xf32>
    tpu.vector_store %arg8[%c0_17, %c0_18], %22 {strides = array<i32>} : memref<1x8xf32, #tpu.memory_space<vmem>>, vector<1x8xf32>,
    return
  }
  func.func @transform_0(%arg0: i32) -> (i32, i32) {
    %c0_i32 = arith.constant 0 : i32
    %c0_i32_0 = arith.constant 0 : i32
    return %c0_i32, %arg0 : i32, i32
  }
  func.func @transform_1(%arg0: i32) -> (i32, i32) {
    %c0_i32 = arith.constant 0 : i32
    %c0_i32_0 = arith.constant 0 : i32
    %c0_i32_1 = arith.constant 0 : i32
    return %c0_i32, %c0_i32_0 : i32, i32
  }
  func.func @transform_2(%arg0: i32) -> (i32, i32) {
    %c0_i32 = arith.constant 0 : i32
    %c0_i32_0 = arith.constant 0 : i32
    %c0_i32_1 = arith.constant 0 : i32
    return %c0_i32, %c0_i32_0 : i32, i32
  }
  func.func @transform_3(%arg0: i32) -> (i32, i32) {
    %c0_i32 = arith.constant 0 : i32
    %c0_i32_0 = arith.constant 0 : i32
    %c0_i32_1 = arith.constant 0 : i32
    return %c0_i32, %c0_i32_0 : i32, i32
  }
  func.func @transform_4(%arg0: i32) -> (i32, i32) {
    %c0_i32 = arith.constant 0 : i32
    %c0_i32_0 = arith.constant 0 : i32
    %c0_i32_1 = arith.constant 0 : i32
    return %c0_i32, %c0_i32_0 : i32, i32
  }
  func.func @transform_5(%arg0: i32) -> (i32, i32) {
    %c0_i32 = arith.constant 0 : i32
    %c0_i32_0 = arith.constant 0 : i32
    %c0_i32_1 = arith.constant 0 : i32
    return %c0_i32, %c0_i32_0 : i32, i32
  }
  func.func @transform_6(%arg0: i32) -> (i32, i32) {
    %c0_i32 = arith.constant 0 : i32
    %c0_i32_0 = arith.constant 0 : i32
    %c0_i32_1 = arith.constant 0 : i32
    return %c0_i32, %c0_i32_0 : i32, i32
  }
  func.func @transform_7(%arg0: i32) -> (i32, i32) {
    %c0_i32 = arith.constant 0 : i32
    %c0_i32_0 = arith.constant 0 : i32
    return %c0_i32, %arg0 : i32, i32
  }
}

</mosaic_0001>

<llo_original>
// kernel: tpu_custom_call.1
$region0: #{tpu_custom_call.1}
  #allocation0 [shape = 'u32[]', space=smem, size = 0x4, offset = 0x4, fixed_abs, tag = 'smem constant byte address 0x4 - core index']
  #allocation1 [shape = 'u32[144,128]{1,0:T(1,128)}', space=vmem, size = 0x12000, scoped, tag = 'internal scratch']
  #allocation2 [shape = 'f32[1,1]{1,0:T(1,128)S(1)}', space=vmem, size = 0x200, scoped, tag = 'scoped memory for tpu_custom_call.1']
  %s0 = inlined_call_operand.vmem [shape: f32[16,8], index: 0, kind: input, shape index: {}]
  %s1 = inlined_call_operand.vmem [shape: f32[32,16], index: 1, kind: input, shape index: {}]
  %s2 = inlined_call_operand.vmem [shape: f32[32,1], index: 2, kind: input, shape index: {}]
  %s3 = inlined_call_operand.vmem [shape: f32[16,32], index: 3, kind: input, shape index: {}]
  %s4 = inlined_call_operand.vmem [shape: f32[16,1], index: 4, kind: input, shape index: {}]
  %s5 = inlined_call_operand.vmem [shape: f32[16,1], index: 5, kind: input, shape index: {}]
  %s6 = inlined_call_operand.<no memory space> [shape: f32[1,1], index: 6, kind: input, shape index: {}]
  %s7 = inlined_call_operand.hbm [shape: f32[1,8], index: 7, kind: output, shape index: {}]
  %s8 = sld [smem:[#allocation0]]
  $region38: #{tpu_custom_call.1} parent=0
    _
  %s10 = ssub.s32 1, %s8
  %s11 = scalar_select 0, %s10, %s8
  %v12 = vstv %s6
  %13 = vst [vmem:[#allocation2] sm:$0x1] %v12
  $region1: #{tpu_custom_call.1} parent=0
    #allocation3 [shape = 'u8[512]{0}', space=vmem, size = 0x400, scoped, tag = 'output window, operand 0, single buffered']
    #allocation4 [shape = 's32[1]{0}', space=sflag, size = 0x4, scoped, tag = 'scoped memory for tpu_custom_call.1']
    %14 = vsyncpa [#allocation4], 0
    // Predicated region
    $region2: #{tpu_custom_call.1} parent=1 // pred_check
      _
    $region3: #{tpu_custom_call.1} parent=1 // pred_check_branch
      %16 = sbr.rel (0) target = $region5
    $region4: #{tpu_custom_call.1} parent=1 // pred_region
      _
    $region5: #{tpu_custom_call.1} parent=1 // pred_fallthru
      _
    // Predicated region
    $region6: #{tpu_custom_call.1} parent=1 // pred_check
      _
    $region7: #{tpu_custom_call.1} parent=1 // pred_check_branch
      %18 = sbr.rel (0) target = $region9
    $region8: #{tpu_custom_call.1} parent=1 // pred_region
      _
    $region9: #{tpu_custom_call.1} parent=1 // pred_fallthru
      _
    // Predicated region
    $region10: #{tpu_custom_call.1} parent=1 // pred_check
      _
    $region11: #{tpu_custom_call.1} parent=1 // pred_check_branch
      %20 = sbr.rel (0) target = $region13
    $region12: #{tpu_custom_call.1} parent=1 // pred_region
      _
    $region13: #{tpu_custom_call.1} parent=1 // pred_fallthru
      _
    // Predicated region
    $region14: #{tpu_custom_call.1} parent=1 // pred_check
      _
    $region15: #{tpu_custom_call.1} parent=1 // pred_check_branch
      %22 = sbr.rel (0) target = $region17
    $region16: #{tpu_custom_call.1} parent=1 // pred_region
      _
    $region17: #{tpu_custom_call.1} parent=1 // pred_fallthru
      _
    // Predicated region
    $region18: #{tpu_custom_call.1} parent=1 // pred_check
      _
    $region19: #{tpu_custom_call.1} parent=1 // pred_check_branch
      %24 = sbr.rel (0) target = $region21
    $region20: #{tpu_custom_call.1} parent=1 // pred_region
      _
    $region21: #{tpu_custom_call.1} parent=1 // pred_fallthru
      _
    // Predicated region
    $region22: #{tpu_custom_call.1} parent=1 // pred_check
      _
    $region23: #{tpu_custom_call.1} parent=1 // pred_check_branch
      %26 = sbr.rel (0) target = $region25
    $region24: #{tpu_custom_call.1} parent=1 // pred_region
      _
    $region25: #{tpu_custom_call.1} parent=1 // pred_fallthru
      _
    // Predicated region
    $region26: #{tpu_custom_call.1} parent=1 // pred_check
      _
    $region27: #{tpu_custom_call.1} parent=1 // pred_check_branch
      %28 = sbr.rel (0) target = $region29
    $region28: #{tpu_custom_call.1} parent=1 // pred_region
      _
    $region29: #{tpu_custom_call.1} parent=1 // pred_fallthru
      _
    %v29 = vld [vmem:[%s0] sm:$0xff]
    %v30 = vld [vmem:[%s0 + $0x8] sm:$0xff]
    %v31 = vld [vmem:[%s1] sm:$0xff]
    %v32 = vld [vmem:[%s1 + $0x8] sm:$0xff]
    %v33 = vld [vmem:[%s1 + $0x10] sm:$0xff]
    %v34 = vld [vmem:[%s1 + $0x18] sm:$0xff]
    %v35 = vld [vmem:[%s2] sm:$0xff]
    %v36 = vld [vmem:[%s2 + $0x8] sm:$0xff]
    %v37 = vld [vmem:[%s2 + $0x10] sm:$0xff]
    %v38 = vld [vmem:[%s2 + $0x18] sm:$0xff]
    %40 = vset.pattern.permute.xlu0 0
    %41 = vperm.xlu0 %40, %v35
    %v42 = vpop.permute.xlu0 %41
    %45 = vset.pattern.permute.xlu0 0
    %46 = vperm.xlu0 %45, %v36
    %v47 = vpop.permute.xlu0 %46
    %50 = vset.pattern.permute.xlu0 0
    %51 = vperm.xlu0 %50, %v37
    %v52 = vpop.permute.xlu0 %51
    %55 = vset.pattern.permute.xlu0 0
    %56 = vperm.xlu0 %55, %v38
    %v57 = vpop.permute.xlu0 %56
    %vm59 = vcmask 130048
    %v61 = vsel %vm59, %v31, 0
    %v64 = vsel %vm59, %v32, 0
    %v67 = vsel %vm59, %v33, 0
    %v70 = vsel %vm59, %v34, 0
    %72 = vmatprep.subr.mxu0 0.0
    %73 = vmatpush1.msra.mxu0 %v29
    %74 = vmatprep.subr.mxu0 0.0
    %75 = vmatpush1.msra.mxu0 %v30
    %76 = vmatprep.subr.mxu0 0.0
    %77 = vmatpush1.msra.mxu0 0.0
    %78 = vmatprep.subr.mxu0 0.0
    %79 = vmatpush1.msra.mxu0 0.0
    %80 = vmatprep.subr.mxu0 0.0
    %81 = vmatpush1.msra.mxu0 0.0
    %82 = vmatprep.subr.mxu0 0.0
    %83 = vmatpush1.msra.mxu0 0.0
    %84 = vmatprep.subr.mxu0 0.0
    %85 = vmatpush1.msra.mxu0 0.0
    %86 = vmatprep.subr.mxu0 0.0
    %87 = vmatpush1.msra.mxu0 0.0
    %88 = vmatprep.subr.mxu0 0.0
    %89 = vmatpush1.msra.mxu0 0.0
    %90 = vmatprep.subr.mxu0 0.0
    %91 = vmatpush1.msra.mxu0 0.0
    %92 = vmatprep.subr.mxu0 0.0
    %93 = vmatpush1.msra.mxu0 0.0
    %94 = vmatprep.subr.mxu0 0.0
    %95 = vmatpush1.msra.mxu0 0.0
    %96 = vmatprep.subr.mxu0 0.0
    %97 = vmatpush1.msra.mxu0 0.0
    %98 = vmatprep.subr.mxu0 0.0
    %99 = vmatpush1.msra.mxu0 0.0
    %100 = vmatprep.subr.mxu0 0.0
    %101 = vmatpush1.msra.mxu0 0.0
    %102 = vmatprep.subr.mxu0 0.0
    %103 = vmatpush1.msra.mxu0 0.0
    %104 = vmatprep.subr.mxu0 0.0
    %105 = vmatpush1.msra.mxu0 0.0
    %106 = vmatprep.subr.mxu0 0.0
    %107 = vmatpush1.msra.mxu0 0.0
    %108 = vmatprep.subr.mxu0 0.0
    %109 = vmatpush1.msra.mxu0 0.0
    %110 = vmatprep.subr.mxu0 0.0
    %111 = vmatpush1.msra.mxu0 0.0
    %112 = vmatprep.subr.mxu0 0.0
    %113 = vmatpush1.msra.mxu0 0.0
    %114 = vmatprep.subr.mxu0 0.0
    %115 = vmatpush1.msra.mxu0 0.0
    %116 = vmatprep.subr.mxu0 0.0
    %117 = vmatpush1.msra.mxu0 0.0
    %118 = vmatprep.subr.mxu0 0.0
    %119 = vmatpush1.msra.mxu0 0.0
    %120 = vmatprep.subr.mxu0 0.0
    %121 = vmatpush1.msra.mxu0 0.0
    %122 = vmatprep.subr.mxu0 0.0
    %123 = vmatpush1.msra.mxu0 0.0
    %124 = vmatprep.subr.mxu0 0.0
    %125 = vmatpush1.msra.mxu0 0.0
    %126 = vmatprep.subr.mxu0 0.0
    %127 = vmatpush1.msra.mxu0 0.0
    %128 = vmatprep.subr.mxu0 0.0
    %129 = vmatpush1.msra.mxu0 0.0
    %130 = vmatprep.subr.mxu0 0.0
    %131 = vmatpush1.msra.mxu0 0.0
    %132 = vmatprep.subr.mxu0 0.0
    %133 = vmatpush1.msra.mxu0 0.0
    %134 = vmatprep.subr.mxu0 0.0
    %135 = vmatpush1.msra.mxu0 0.0
    %136 = vmatprep.mubr.f32.mxu0 0.0
    %137 = vmatmul.mubr.f32.gmra.mrb[0].mxu0 %v61
    %v138 = vpop.f32.mrb[0].mxu0
    %v139 = vadd.f32 %v42, %v138
    %v140 = vpop.f32.mrb[0].mxu0
    %141 = vmatprep.mubr.f32.mxu0 0.0
    %142 = vmatmul.mubr.f32.gmra.mrb[0].mxu0 %v64
    %v143 = vpop.f32.mrb[0].mxu0
    %v144 = vadd.f32 %v47, %v143
    %v145 = vpop.f32.mrb[0].mxu0
    %146 = vmatprep.mubr.f32.mxu0 0.0
    %147 = vmatmul.mubr.f32.gmra.mrb[0].mxu0 %v67
    %v148 = vpop.f32.mrb[0].mxu0
    %v149 = vadd.f32 %v52, %v148
    %v150 = vpop.f32.mrb[0].mxu0
    %151 = vmatprep.mubr.f32.mxu0 0.0
    %152 = vmatmul.mubr.f32.gmra.mrb[0].mxu0 %v70
    %v153 = vpop.f32.mrb[0].mxu0
    %v154 = vadd.f32 %v57, %v153
    %v155 = vpop.f32.mrb[0].mxu0
    %156 = vdwg.mxu0
    %v157 = vmax.f32 %v139, 0.0
    %v158 = vmax.f32 %v144, 0.0
    %v159 = vmax.f32 %v149, 0.0
    %v160 = vmax.f32 %v154, 0.0
    %v161 = vld [vmem:[%s3] sm:$0xff]
    %v162 = vld [vmem:[%s3 + $0x8] sm:$0xff]
    %v163 = vld [vmem:[%s4] sm:$0xff]
    %v164 = vld [vmem:[%s4 + $0x8] sm:$0xff]
    %166 = vset.pattern.permute.xlu0 0
    %167 = vperm.xlu0 %166, %v163
    %v168 = vpop.permute.xlu0 %167
    %171 = vset.pattern.permute.xlu0 0
    %172 = vperm.xlu0 %171, %v164
    %v173 = vpop.permute.xlu0 %172
    %vm175 = vcmask 261120
    %v177 = vsel %vm175, %v161, 0
    %v180 = vsel %vm175, %v162, 0
    %182 = vmatprep.subr.mxu0 0.0
    %183 = vmatpush1.msra.mxu0 %v157
    %184 = vmatprep.subr.mxu0 0.0
    %185 = vmatpush1.msra.mxu0 %v158
    %186 = vmatprep.subr.mxu0 0.0
    %187 = vmatpush1.msra.mxu0 %v159
    %188 = vmatprep.subr.mxu0 0.0
    %189 = vmatpush1.msra.mxu0 %v160
    %190 = vmatprep.subr.mxu0 0.0
    %191 = vmatpush1.msra.mxu0 0.0
    %192 = vmatprep.subr.mxu0 0.0
    %193 = vmatpush1.msra.mxu0 0.0
    %194 = vmatprep.subr.mxu0 0.0
    %195 = vmatpush1.msra.mxu0 0.0
    %196 = vmatprep.subr.mxu0 0.0
    %197 = vmatpush1.msra.mxu0 0.0
    %198 = vmatprep.subr.mxu0 0.0
    %199 = vmatpush1.msra.mxu0 0.0
    %200 = vmatprep.subr.mxu0 0.0
    %201 = vmatpush1.msra.mxu0 0.0
    %202 = vmatprep.subr.mxu0 0.0
    %203 = vmatpush1.msra.mxu0 0.0
    %204 = vmatprep.subr.mxu0 0.0
    %205 = vmatpush1.msra.mxu0 0.0
    %206 = vmatprep.subr.mxu0 0.0
    %207 = vmatpush1.msra.mxu0 0.0
    %208 = vmatprep.subr.mxu0 0.0
    %209 = vmatpush1.msra.mxu0 0.0
    %210 = vmatprep.subr.mxu0 0.0
    %211 = vmatpush1.msra.mxu0 0.0
    %212 = vmatprep.subr.mxu0 0.0
    %213 = vmatpush1.msra.mxu0 0.0
    %214 = vmatprep.subr.mxu0 0.0
    %215 = vmatpush1.msra.mxu0 0.0
    %216 = vmatprep.subr.mxu0 0.0
    %217 = vmatpush1.msra.mxu0 0.0
    %218 = vmatprep.subr.mxu0 0.0
    %219 = vmatpush1.msra.mxu0 0.0
    %220 = vmatprep.subr.mxu0 0.0
    %221 = vmatpush1.msra.mxu0 0.0
    %222 = vmatprep.subr.mxu0 0.0
    %223 = vmatpush1.msra.mxu0 0.0
    %224 = vmatprep.subr.mxu0 0.0
    %225 = vmatpush1.msra.mxu0 0.0
    %226 = vmatprep.subr.mxu0 0.0
    %227 = vmatpush1.msra.mxu0 0.0
    %228 = vmatprep.subr.mxu0 0.0
    %229 = vmatpush1.msra.mxu0 0.0
    %230 = vmatprep.subr.mxu0 0.0
    %231 = vmatpush1.msra.mxu0 0.0
    %232 = vmatprep.subr.mxu0 0.0
    %233 = vmatpush1.msra.mxu0 0.0
    %234 = vmatprep.subr.mxu0 0.0
    %235 = vmatpush1.msra.mxu0 0.0
    %236 = vmatprep.subr.mxu0 0.0
    %237 = vmatpush1.msra.mxu0 0.0
    %238 = vmatprep.subr.mxu0 0.0
    %239 = vmatpush1.msra.mxu0 0.0
    %240 = vmatprep.subr.mxu0 0.0
    %241 = vmatpush1.msra.mxu0 0.0
    %242 = vmatprep.subr.mxu0 0.0
    %243 = vmatpush1.msra.mxu0 0.0
    %244 = vmatprep.subr.mxu0 0.0
    %245 = vmatpush1.msra.mxu0 0.0
    %246 = vmatprep.mubr.f32.mxu0 0.0
    %247 = vmatmul.mubr.f32.gmra.mrb[0].mxu0 %v177
    %v248 = vpop.f32.mrb[0].mxu0
    %v249 = vadd.f32 %v168, %v248
    %v250 = vpop.f32.mrb[0].mxu0
    %251 = vmatprep.mubr.f32.mxu0 0.0
    %252 = vmatmul.mubr.f32.gmra.mrb[0].mxu0 %v180
    %v253 = vpop.f32.mrb[0].mxu0
    %v254 = vadd.f32 %v173, %v253
    %v255 = vpop.f32.mrb[0].mxu0
    %256 = vdwg.mxu0
    %v257 = vmax.f32 %v249, 0.0
    %v258 = vmax.f32 %v254, 0.0
    %v259 = vld [vmem:[%s5] sm:$0xff]
    %v260 = vld [vmem:[%s5 + $0x8] sm:$0xff]
    %262 = vset.pattern.permute.xlu0 0
    %263 = vperm.xlu0 %262, %v259
    %v264 = vpop.permute.xlu0 %263
    %267 = vset.pattern.permute.xlu0 0
    %268 = vperm.xlu0 %267, %v260
    %v269 = vpop.permute.xlu0 %268
    %v271 = vmul.f32 %v257, %v264
    %v272 = vmul.f32 %v258, %v269
    %vm273 = vcmask 64512
    %v274 = vsel %vm273, %v271, 0.0
    %v275 = vsel %vm273, %v272, 0.0
    %v276 = vadd.f32 %v274, %v275
    %v277 = vrot.slane %v276, 4
    %v278 = vadd.f32 %v276, %v277
    %v279 = vrot.slane %v278, 2
    %v280 = vadd.f32 %v278, %v279
    %v281 = vrot.slane %v280, 1
    %v282 = vadd.f32 %v280, %v281
    %v283 = vld [vmem:[#allocation2] sm:$0x1]
    %285 = vset.pattern.permute.xlu0 0
    %286 = vperm.xlu0 %285, %v283
    %v287 = vpop.permute.xlu0 %286
    %v289 = vlaneseq
    %v290 = vshrl.u32 %v289, 7
    %v291 = vsub.s32 0, %v290
    %v292 = vrot.slane %v287, %v291
    %v293 = vadd.f32 %v282, %v292
    %vm294 = vcmask 57344
    %295 = vst.msk [vmem:[#allocation3] sm:$0x1] %vm294, %v293
    // Predicated region
    $region30: #{tpu_custom_call.1} parent=1 // pred_check
      _
    $region31: #{tpu_custom_call.1} parent=1 // pred_check_branch
      %297 = sbr.rel (0) target = $region33
    $region32: #{tpu_custom_call.1} parent=1 // pred_region
      %s299 = ssub.s32 16, 16
      %300 = vsyncadd [#allocation4], %s299
      %s302 = sshll.u32 [#allocation3], 4
      %s303 = int_to_ptr.vmem [resolvable:$true] %s302
      %305 = dma.vmem_to_hbm [thread:$0]  %s303, 16, %s7, [#allocation4]
    $region33: #{tpu_custom_call.1} parent=1 // pred_fallthru
      _
    // Predicated region
    $region34: #{tpu_custom_call.1} parent=1 // pred_check
      _
    $region35: #{tpu_custom_call.1} parent=1 // pred_check_branch
      %307 = sbr.rel (0) target = $region37
    $region36: #{tpu_custom_call.1} parent=1 // pred_region
      %308 = dma.done [#allocation4], 16
    $region37: #{tpu_custom_call.1} parent=1 // pred_fallthru
      _
    %309 = vsyncpa [#allocation4], 1

</llo_original>
